<compile_context>
chip_gen: v5e
topology: v5e:2x2
jax: 0.10.0
libtpu: 0.0.40
codegen_flags: <defaults>
</compile_context>

<pallas_src>
import functools

import numpy as np

import jax
import jax.numpy as jnp
from jax.experimental import pallas as pl
from jax.experimental.pallas import tpu as pltpu

# Scoped VMEM: safe on v7x (64 MiB physical); raise toward 96 MiB on v5e/v6e
# together with tile_e once tiles grow.
_VMEM_LIMIT = 48 * 1024 * 1024


def _round_up(x, m):
    return ((x + m - 1) // m) * m


def _fit_tile(n, pref):
    # Prefer the requested tile; shrink (multiple of 8 sublanes) for toy sizes.
    return pref if n >= pref else _round_up(n, 8)


def _pad_rows(a, n_to):
    pad = n_to - a.shape[0]
    return a if pad == 0 else jnp.pad(a, ((0, pad), (0, 0)))


# ---------------------------------------------------------------------------
# Kernel 1: row-tiled Linear + folded BatchNorm1d on the reference points,
# fused with the gather-table assembly.  Output (bf16):
#   table[:, :C0]        = BN(mlp_f0(ref_feat))
#   table[:,  C0]        = 1.0                      (carries `pos` in scatter)
#   table[:, C0+1:C0+4]  = ref xyz rounded to bf16  (hi)
#   table[:, C0+4:C0+7]  = f32 residual of xyz      (lo)  -> hi+lo ~ f32 coords
# ---------------------------------------------------------------------------
def _ref_table_kernel(bxyz_ref, x_ref, w_ref, scale_ref, shift_ref, o_ref):
    c0 = w_ref.shape[1]
    y = jnp.dot(x_ref[...], w_ref[...], preferred_element_type=jnp.float32)
    y = y * scale_ref[...] + shift_ref[...]
    xyz = bxyz_ref[:, 1:4]
    hi = xyz.astype(jnp.bfloat16)
    lo = (xyz - hi.astype(jnp.float32)).astype(jnp.bfloat16)
    o_ref[:, 0:c0] = y.astype(jnp.bfloat16)
    o_ref[:, c0:c0 + 1] = jnp.ones((y.shape[0], 1), jnp.bfloat16)
    o_ref[:, c0 + 1:c0 + 4] = hi
    o_ref[:, c0 + 4:c0 + 7] = lo


def _ref_table_tiled(ref_bxyz, ref_feat, w, scale, shift, tr):
    n, c_in = ref_feat.shape
    c0 = w.shape[1]
    tw = c0 + 7
    return pl.pallas_call(
        _ref_table_kernel,
        out_shape=jax.ShapeDtypeStruct((n, tw), jnp.bfloat16),
        grid=(n // tr,),
        in_specs=[
            pl.BlockSpec((tr, 4), lambda i: (i, 0)),
            pl.BlockSpec((tr, c_in), lambda i: (i, 0)),
            pl.BlockSpec((c_in, c0), lambda i: (0, 0)),
            pl.BlockSpec((1, c0), lambda i: (0, 0)),
            pl.BlockSpec((1, c0), lambda i: (0, 0)),
        ],
        out_specs=pl.BlockSpec((tr, tw), lambda i: (i, 0)),
        compiler_params=pltpu.CompilerParams(
            dimension_semantics=("parallel",),
            vmem_limit_bytes=_VMEM_LIMIT),
    )(ref_bxyz, ref_feat, w, scale.reshape(1, -1), shift.reshape(1, -1))


# ---------------------------------------------------------------------------
# Edge schedule (host-side, numpy): sort edges by e_qry, pad to whole edge
# blocks, and build per-query-tile CSR block ranges for scalar prefetch.
# ---------------------------------------------------------------------------
def _build_edge_schedule(e_ref, e_qry, nqp, tq, te):
    e_ref = np.asarray(e_ref, dtype=np.int32)
    e_qry = np.asarray(e_qry, dtype=np.int32)
    ne = int(e_ref.shape[0])

    order = np.argsort(e_qry, kind="stable")
    e_ref_s = e_ref[order]
    e_qry_s = e_qry[order]

    nep = _round_up(max(ne, te), te)
    n_eb = nep // te
    er_p = np.zeros(nep, np.int32)
    er_p[:ne] = e_ref_s
    eq_p = np.full(nep, -1, np.int32)          # padded edges match no query
    eq_p[:ne] = e_qry_s

    n_qt = nqp // tq
    nblk = np.zeros(n_qt, np.int32)
    first = np.zeros(n_qt, np.int32)
    for i in range(n_qt):
        lo = int(np.searchsorted(e_qry_s, i * tq, side="left"))
        hi = int(np.searchsorted(e_qry_s, (i + 1) * tq, side="left"))
        if hi > lo:
            first[i] = lo // te
            nblk[i] = (hi - 1) // te - lo // te + 1
    maxb = max(1, int(nblk.max()))

    # Block index table; steps past nblk[i] repeat the last valid block so the
    # (masked) DMA index never changes -> no extra fetch.
    eblk = np.zeros((n_qt, maxb), np.int32)
    for i in range(n_qt):
        for e in range(maxb):
            eblk[i, e] = first[i] + min(e, max(int(nblk[i]) - 1, 0))

    return (er_p.reshape(n_eb, 1, te), eq_p.reshape(n_eb, 1, te),
            eblk.reshape(-1), nblk, maxb)


# ---------------------------------------------------------------------------
# Kernel 2: fused query-side kernel.
#   grid = (query tiles [parallel], edge blocks of this tile [arbitrary])
#   per step: lane-dense edge block -> transposed one-hots (bf16) ->
#   chunked table gather + query-coord gather -> inverse-distance weights ->
#   one scatter matmul carrying [pos*feat | pos] into a resident accumulator.
#   finalize: zero-guarded normalization + skip Linear/BN + ReLU + MLP stack.
# ---------------------------------------------------------------------------
def _edge_query_kernel(eblk_ref, nblk_ref, e_ref_ref, e_qry_ref, tab_ref,
                       qtab_ref, qfeat_ref, ws_ref, ssc_ref, ssh_ref,
                       *rest, num_mlp, c0, rc):
    del eblk_ref                                 # only used by the index maps
    mlp_refs = rest[:3 * num_mlp]
    o_ref, acc_ref = rest[3 * num_mlp:]

    i = pl.program_id(0)
    e = pl.program_id(1)
    tq = qtab_ref.shape[0]
    te = e_ref_ref.shape[2]
    nrp, tw = tab_ref.shape

    @pl.when(e == 0)
    def _():
        acc_ref[...] = jnp.zeros_like(acc_ref)

    # Accumulate only over this query tile's valid edge blocks.
    @pl.when(e < nblk_ref[i])
    def _():
        er = e_ref_ref[0]                        # [1, te] lane-dense indices
        eq = e_qry_ref[0] - i * tq               # local query ids (or <0 / >=tq)

        # Scatter one-hot (transposed): queries on sublanes, edges on lanes.
        oh_q = (eq == jax.lax.broadcasted_iota(jnp.int32, (tq, te), 0)
                ).astype(jnp.bfloat16)

        # Chunked one-hot gather of the resident bf16 table: per-chunk VMEM is
        # [rc, te] instead of [te, nrp]; bf16 one-hots are exact, f32 accum.
        g = jnp.zeros((te, tw), jnp.float32)
        for c in range(0, nrp, rc):
            oh_r = ((er - c) == jax.lax.broadcasted_iota(
                jnp.int32, (rc, te), 0)).astype(jnp.bfloat16)
            g = g + jax.lax.dot_general(
                oh_r, tab_ref[c:c + rc, :],
                (((0,), (0,)), ((), ())),
                preferred_element_type=jnp.float32)          # [te, tw]

        # Per-edge query coords (hi/lo split), reusing the scatter one-hot.
        qg = jax.lax.dot_general(
            oh_q, qtab_ref[...],
            (((0,), (0,)), ((), ())),
            preferred_element_type=jnp.float32)              # [te, 6]

        r_xyz = g[:, c0 + 1:c0 + 4] + g[:, c0 + 4:c0 + 7]
        q_xyz = qg[:, 0:3] + qg[:, 3:6]
        diff = r_xyz - q_xyz
        dist = jnp.sqrt(jnp.sum(diff * diff, axis=-1, keepdims=True))
        pos = pl.reciprocal(dist + 1e-8, approx=True)        # EUP slot

        # payload[:, :c0] = pos * feat2, payload[:, c0] = pos (table ones col);
        # features start at lane 0, the weight-sum column is last.
        payload = (pos * g[:, :c0 + 1]).astype(jnp.bfloat16)
        acc_ref[...] += jnp.dot(oh_q, payload,
                                preferred_element_type=jnp.float32)

    # Finalize once per query tile: normalize, skip Linear+BN, ReLU, MLP stack.
    @pl.when(e == pl.num_programs(1) - 1)
    def _():
        agg = acc_ref[:, 0:c0]
        wsum = acc_ref[:, c0:c0 + 1]
        # Zero-guarded normalization (queries with no incident edges -> 0).
        q_feat = agg / jnp.where(wsum > 0.0, wsum, 1.0)
        skip = jnp.dot(qfeat_ref[...], ws_ref[...],
                       preferred_element_type=jnp.float32)
        skip = skip * ssc_ref[...] + ssh_ref[...]
        x = jnp.maximum(q_feat + skip, 0.0)
        for li in range(num_mlp):                            # unrolled
            w = mlp_refs[3 * li][...]
            sc = mlp_refs[3 * li + 1][...]
            sh = mlp_refs[3 * li + 2][...]
            x = jnp.maximum(
                jnp.dot(x, w, preferred_element_type=jnp.float32) * sc + sh,
                0.0)
        o_ref[...] = x


def _edge_query_fused(eblk, nblk, maxb, e_ref_b, e_qry_b, ref_table, qtab,
                      qry_feat, w_s0, scale_s0, shift_s0, mlp_layers, tq, rc):
    n_eb, _, te = e_ref_b.shape
    nqp = qtab.shape[0]
    nrp, tw = ref_table.shape
    cs = qry_feat.shape[1]
    c0 = w_s0.shape[1]
    c_last = mlp_layers[-1][0].shape[1] if mlp_layers else c0
    num_mlp = len(mlp_layers)
    n_qt = nqp // tq
    assert nrp % rc == 0

    # index maps receive (i, e, *scalar_prefetch_refs)
    def edge_map(i, e, eblk_ref, nblk_ref):
        return (eblk_ref[i * maxb + e], 0, 0)

    def qrow(i, e, eblk_ref, nblk_ref):
        return (i, 0)

    def const(i, e, eblk_ref, nblk_ref):
        return (0, 0)

    in_specs = [
        pl.BlockSpec((1, 1, te), edge_map),       # e_ref  (lane-dense row)
        pl.BlockSpec((1, 1, te), edge_map),       # e_qry  (lane-dense row)
        pl.BlockSpec((nrp, tw), const),           # bf16 gather table (resident)
        pl.BlockSpec((tq, 6), qrow),              # query xyz hi/lo (bf16)
        pl.BlockSpec((tq, cs), qrow),             # query skip features
        pl.BlockSpec((cs, c0), const),            # skip weight
        pl.BlockSpec((1, c0), const),             # skip BN scale
        pl.BlockSpec((1, c0), const),             # skip BN shift
    ]
    args = [e_ref_b, e_qry_b, ref_table, qtab, qry_feat,
            w_s0, scale_s0.reshape(1, -1), shift_s0.reshape(1, -1)]
    for w, sc, sh in mlp_layers:
        in_specs += [pl.BlockSpec(w.shape, const),
                     pl.BlockSpec((1, w.shape[1]), const),
                     pl.BlockSpec((1, w.shape[1]), const)]
        args += [w, sc.reshape(1, -1), sh.reshape(1, -1)]

    return pl.pallas_call(
        functools.partial(_edge_query_kernel, num_mlp=num_mlp, c0=c0, rc=rc),
        out_shape=jax.ShapeDtypeStruct((nqp, c_last), jnp.float32),
        grid_spec=pltpu.PrefetchScalarGridSpec(
            num_scalar_prefetch=2,
            grid=(n_qt, maxb),                    # reduction (edge) axis last
            in_specs=in_specs,
            out_specs=pl.BlockSpec((tq, c_last), qrow),
            scratch_shapes=[pltpu.VMEM((tq, c0 + 1), jnp.float32)]),
        compiler_params=pltpu.CompilerParams(
            dimension_semantics=("parallel", "arbitrary"),
            vmem_limit_bytes=_VMEM_LIMIT),
    )(eblk, nblk, *args)


# ---------------------------------------------------------------------------
# Module: parameter init (deterministic, eval-mode BN folded) + forward
# ---------------------------------------------------------------------------
def fold_bn(gamma, beta, mean, var, bias=None, eps=1e-5):
    scale = gamma / jnp.sqrt(var + eps)
    b = bias if bias is not None else 0.0
    shift = (b - mean) * scale + beta
    return scale, shift


def init_params(key, prev_channel, skip_channel, mlp_channels):
    ks = iter(jax.random.split(key, 6 * len(mlp_channels) + 4))

    def bn(c):
        gamma = 1.0 + 0.1 * jax.random.normal(next(ks), (c,), jnp.float32)
        beta = 0.1 * jax.random.normal(next(ks), (c,), jnp.float32)
        mean = 0.1 * jax.random.normal(next(ks), (c,), jnp.float32)
        var = 1.0 + 0.1 * jax.random.uniform(next(ks), (c,), jnp.float32)
        return gamma, beta, mean, var

    c0 = mlp_channels[0]
    w_f0 = 0.1 * jax.random.normal(next(ks), (prev_channel, c0), jnp.float32)
    scale_f0, shift_f0 = fold_bn(*bn(c0))
    w_s0 = 0.1 * jax.random.normal(next(ks), (skip_channel, c0), jnp.float32)
    scale_s0, shift_s0 = fold_bn(*bn(c0))

    mlp_layers = []
    last = c0
    for c in mlp_channels[1:]:
        w = 0.1 * jax.random.normal(next(ks), (last, c), jnp.float32)
        b = 0.1 * jax.random.normal(next(ks), (c,), jnp.float32)
        scale, shift = fold_bn(*bn(c), bias=b)
        mlp_layers.append((w, scale, shift))
        last = c

    return dict(w_f0=w_f0, scale_f0=scale_f0, shift_f0=shift_f0,
                w_s0=w_s0, scale_s0=scale_s0, shift_s0=shift_s0,
                mlp_layers=mlp_layers)


def edge_conv_up_forward(params, ref_bxyz, ref_feat, qry_bxyz, qry_feat,
                         e_ref, e_qry, *, tile_q=256, tile_e=512,
                         ref_chunk=1024):
    nr, nq = ref_bxyz.shape[0], qry_bxyz.shape[0]

    # Ref-side padding so the gather chunk divides the padded point count.
    rc = ref_chunk if nr >= ref_chunk else _round_up(nr, 8)
    nrp = _round_up(nr, rc)
    tr = 256 if rc % 256 == 0 else rc             # kernel-1 row tile (| nrp)

    tq = _fit_tile(nq, tile_q)
    nqp = _round_up(nq, tq)
    te = _fit_tile(e_ref.shape[0], tile_e)

    ref_bxyz_p = _pad_rows(ref_bxyz, nrp)
    ref_feat_p = _pad_rows(ref_feat, nrp)
    qry_bxyz_p = _pad_rows(qry_bxyz, nqp)
    qry_feat_p = _pad_rows(qry_feat, nqp)

    # Kernel 1: Linear + folded BN + fused bf16 table [feat2 | 1 | hi | lo].
    ref_table = _ref_table_tiled(ref_bxyz_p, ref_feat_p, params["w_f0"],
                                 params["scale_f0"], params["shift_f0"], tr)

    # Pre-sliced query coord table (hi/lo bf16 split; 6 lanes, built once).
    qxyz = qry_bxyz_p[:, 1:4]
    qhi = qxyz.astype(jnp.bfloat16)
    qlo = (qxyz - qhi.astype(jnp.float32)).astype(jnp.bfloat16)
    qtab = jnp.concatenate([qhi, qlo], axis=-1)

    # Sorted-edge CSR block schedule (scalar-prefetched).
    e_ref_b, e_qry_b, eblk, nblk, maxb = _build_edge_schedule(
        e_ref, e_qry, nqp, tq, te)

    out = _edge_query_fused(
        jnp.asarray(eblk), jnp.asarray(nblk), maxb,
        jnp.asarray(e_ref_b), jnp.asarray(e_qry_b),
        ref_table, qtab, qry_feat_p,
        params["w_s0"], params["scale_s0"], params["shift_s0"],
        params["mlp_layers"], tq, rc)
    return out[:nq]


# pure-JAX reference (same math as the PyTorch module, eval-mode BN folded)
def reference(params, ref_bxyz, ref_feat, qry_bxyz, qry_feat, e_ref, e_qry):
    nq = qry_bxyz.shape[0]
    diff = ref_bxyz[e_ref, 1:4] - qry_bxyz[e_qry, 1:4]
    dist = jnp.sqrt(jnp.sum(diff * diff, axis=-1))
    pos = 1.0 / (dist + 1e-8)
    wsum = jax.ops.segment_sum(pos, e_qry, num_segments=nq)
    weight = pos / wsum[e_qry]
    rf2 = (ref_feat @ params["w_f0"]) * params["scale_f0"] + params["shift_f0"]
    qf = jax.ops.segment_sum(rf2[e_ref] * weight[:, None], e_qry, num_segments=nq)
    skip = (qry_feat @ params["w_s0"]) * params["scale_s0"] + params["shift_s0"]
    qf = jax.nn.relu(qf + skip)
    for w, scale, shift in params["mlp_layers"]:
        qf = jax.nn.relu((qf @ w) * scale + shift)
    return qf


if __name__ == "__main__":
    key = jax.random.PRNGKey(0)
    k_par, k_rx, k_rf, k_qx, k_qf, k_er, k_eq = jax.random.split(key, 7)

    PREV_CHANNEL, SKIP_CHANNEL, MLP_CHANNELS = 8, 6, [16, 32]
    Nr, Nq, E = 80, 48, 160

    params = init_params(k_par, PREV_CHANNEL, SKIP_CHANNEL, MLP_CHANNELS)

    ref_bxyz = jax.random.uniform(k_rx, (Nr, 4), jnp.float32)
    ref_feat = jax.random.normal(k_rf, (Nr, PREV_CHANNEL), jnp.float32)
    qry_bxyz = jax.random.uniform(k_qx, (Nq, 4), jnp.float32)
    qry_feat = jax.random.normal(k_qf, (Nq, SKIP_CHANNEL), jnp.float32)
    e_ref = jax.random.randint(k_er, (E,), 0, Nr, jnp.int32)
    e_qry = jax.random.randint(k_eq, (E,), 0, Nq, jnp.int32)

    # Small tiles on purpose: exercises multiple query tiles, multiple edge
    # blocks per tile (incl. shared boundary blocks) and >1 ref gather chunk.
    out = edge_conv_up_forward(params, ref_bxyz, ref_feat, qry_bxyz, qry_feat,
                               e_ref, e_qry, tile_q=16, tile_e=32, ref_chunk=32)
    out = jax.block_until_ready(out)

    ref_out = reference(params, ref_bxyz, ref_feat, qry_bxyz, qry_feat,
                        e_ref, e_qry)
    assert out.shape == (Nq, MLP_CHANNELS[-1])
    # 1e-2 tolerance: bf16 table / payload (features ~1e-3 rel) + the EUP
    # approximate reciprocal; coordinates keep ~f32 accuracy via hi/lo split.
    err = float(jnp.max(jnp.abs(out - ref_out)))
    assert jnp.allclose(out, ref_out, rtol=1e-2, atol=1e-2), err
    print("KERNEL_OK")
</pallas_src>

<mosaic_0001>
module attributes {stable_mosaic.version = 11 : i64} {
  func.func @_ref_table_kernel(%arg0: i32, %arg1: memref<32x4xf32, #tpu.memory_space<vmem>>, %arg2: memref<32x8xf32, #tpu.memory_space<vmem>>, %arg3: memref<8x16xf32, #tpu.memory_space<vmem>>, %arg4: memref<1x16xf32, #tpu.memory_space<vmem>>, %arg5: memref<1x16xf32, #tpu.memory_space<vmem>>, %arg6: memref<32x23xbf16, #tpu.memory_space<vmem>>) attributes {dimension_semantics = [#tpu.dimension_semantics<parallel>], iteration_bounds = array<i64: 3>, scalar_prefetch = 0 : i64, scratch_operands = 0 : i64, tpu.core_type = #tpu.core_type<tc>, window_params = [{transform_indices = @transform_0, window_bounds = array<i64: 32, 4>}, {transform_indices = @transform_1, window_bounds = array<i64: 32, 8>}, {pipeline_mode = #tpu.pipeline_mode<synchronous>, transform_indices = @transform_2, window_bounds = array<i64: 8, 16>}, {pipeline_mode = #tpu.pipeline_mode<synchronous>, transform_indices = @transform_3, window_bounds = array<i64: 1, 16>}, {pipeline_mode = #tpu.pipeline_mode<synchronous>, transform_indices = @transform_4, window_bounds = array<i64: 1, 16>}, {transform_indices = @transform_5, window_bounds = array<i64: 32, 23>}]} {
    %c0 = arith.constant 0 : index
    %c0_0 = arith.constant 0 : index
    %0 = vector.load %arg2[%c0, %c0_0] : memref<32x8xf32, #tpu.memory_space<vmem>>, vector<32x8xf32>
    %c0_1 = arith.constant 0 : index
    %c0_2 = arith.constant 0 : index
    %1 = vector.load %arg3[%c0_1, %c0_2] : memref<8x16xf32, #tpu.memory_space<vmem>>, vector<8x16xf32>
    %cst = arith.constant dense<0.000000e+00> : vector<32x16xf32>
    %2 = tpu.matmul %0, %1, %cst {dimension_numbers = #tpu.dot_dimension_numbers<[1], [0], [0], [1], [0, 0, 1, 1], [], []>} : vector<32x8xf32>, vector<8x16xf32>, vector<32x16xf32> -> vector<32x16xf32>
    %c0_3 = arith.constant 0 : index
    %c0_4 = arith.constant 0 : index
    %3 = vector.load %arg4[%c0_3, %c0_4] : memref<1x16xf32, #tpu.memory_space<vmem>>, vector<1x16xf32>
    %4 = vector.broadcast %3 : vector<1x16xf32> to vector<32x16xf32>
    %5 = arith.mulf %2, %4 : vector<32x16xf32>
    %c0_5 = arith.constant 0 : index
    %c0_6 = arith.constant 0 : index
    %6 = vector.load %arg5[%c0_5, %c0_6] : memref<1x16xf32, #tpu.memory_space<vmem>>, vector<1x16xf32>
    %7 = vector.broadcast %6 : vector<1x16xf32> to vector<32x16xf32>
    %8 = arith.addf %5, %7 : vector<32x16xf32>
    %c0_7 = arith.constant 0 : index
    %c1 = arith.constant 1 : index
    %9 = vector.load %arg1[%c0_7, %c1] : memref<32x4xf32, #tpu.memory_space<vmem>>, vector<32x3xf32>
    %10 = arith.truncf %9 : vector<32x3xf32> to vector<32x3xbf16>
    %11 = arith.extf %10 : vector<32x3xbf16> to vector<32x3xf32>
    %12 = arith.subf %9, %11 : vector<32x3xf32>
    %13 = arith.truncf %12 : vector<32x3xf32> to vector<32x3xbf16>
    %14 = arith.truncf %8 : vector<32x16xf32> to vector<32x16xbf16>
    %c0_8 = arith.constant 0 : index
    %c0_9 = arith.constant 0 : index
    %15 = vector.load %arg6[%c0_8, %c0_9] : memref<32x23xbf16, #tpu.memory_space<vmem>>, vector<32x16xbf16>
    tpu.vector_store %arg6[%c0_8, %c0_9], %14 {strides = array<i32>} : memref<32x23xbf16, #tpu.memory_space<vmem>>, vector<32x16xbf16>,
    %cst_10 = arith.constant 1.000000e+00 : bf16
    %16 = vector.broadcast %cst_10 : bf16 to vector<32x1xbf16>
    %c0_11 = arith.constant 0 : index
    %c16 = arith.constant 16 : index
    %17 = vector.load %arg6[%c0_11, %c16] : memref<32x23xbf16, #tpu.memory_space<vmem>>, vector<32x1xbf16>
    tpu.vector_store %arg6[%c0_11, %c16], %16 {strides = array<i32>} : memref<32x23xbf16, #tpu.memory_space<vmem>>, vector<32x1xbf16>,
    %c0_12 = arith.constant 0 : index
    %c17 = arith.constant 17 : index
    %18 = vector.load %arg6[%c0_12, %c17] : memref<32x23xbf16, #tpu.memory_space<vmem>>, vector<32x3xbf16>
    tpu.vector_store %arg6[%c0_12, %c17], %10 {strides = array<i32>} : memref<32x23xbf16, #tpu.memory_space<vmem>>, vector<32x3xbf16>,
    %c0_13 = arith.constant 0 : index
    %c20 = arith.constant 20 : index
    %19 = vector.load %arg6[%c0_13, %c20] : memref<32x23xbf16, #tpu.memory_space<vmem>>, vector<32x3xbf16>
    tpu.vector_store %arg6[%c0_13, %c20], %13 {strides = array<i32>} : memref<32x23xbf16, #tpu.memory_space<vmem>>, vector<32x3xbf16>,
    return
  }
  func.func @transform_0(%arg0: i32) -> (i32, i32) {
    %c0_i32 = arith.constant 0 : i32
    %c0_i32_0 = arith.constant 0 : i32
    return %arg0, %c0_i32 : i32, i32
  }
  func.func @transform_1(%arg0: i32) -> (i32, i32) {
    %c0_i32 = arith.constant 0 : i32
    %c0_i32_0 = arith.constant 0 : i32
    return %arg0, %c0_i32 : i32, i32
  }
  func.func @transform_2(%arg0: i32) -> (i32, i32) {
    %c0_i32 = arith.constant 0 : i32
    %c0_i32_0 = arith.constant 0 : i32
    %c0_i32_1 = arith.constant 0 : i32
    return %c0_i32, %c0_i32_0 : i32, i32
  }
  func.func @transform_3(%arg0: i32) -> (i32, i32) {
    %c0_i32 = arith.constant 0 : i32
    %c0_i32_0 = arith.constant 0 : i32
    %c0_i32_1 = arith.constant 0 : i32
    return %c0_i32, %c0_i32_0 : i32, i32
  }
  func.func @transform_4(%arg0: i32) -> (i32, i32) {
    %c0_i32 = arith.constant 0 : i32
    %c0_i32_0 = arith.constant 0 : i32
    %c0_i32_1 = arith.constant 0 : i32
    return %c0_i32, %c0_i32_0 : i32, i32
  }
  func.func @transform_5(%arg0: i32) -> (i32, i32) {
    %c0_i32 = arith.constant 0 : i32
    %c0_i32_0 = arith.constant 0 : i32
    return %arg0, %c0_i32 : i32, i32
  }
}

</mosaic_0001>

<llo_original>
// kernel: tpu_custom_call.1
$region0: #{tpu_custom_call.1}
  #allocation0 [shape = 'u32[]', space=smem, size = 0x4, offset = 0x4, fixed_abs, tag = 'smem constant byte address 0x4 - core index']
  #allocation1 [shape = 'u32[72,128]{1,0:T(1,128)}', space=vmem, size = 0x9000, scoped, tag = 'internal scratch']
  %s0 = inlined_call_operand.vmem [shape: f32[96,4], index: 0, kind: input, shape index: {}]
  %s1 = inlined_call_operand.vmem [shape: f32[96,8], index: 1, kind: input, shape index: {}]
  %s2 = inlined_call_operand.vmem [shape: f32[8,16], index: 2, kind: input, shape index: {}]
  %s3 = inlined_call_operand.vmem [shape: f32[1,16], index: 3, kind: input, shape index: {}]
  %s4 = inlined_call_operand.vmem [shape: f32[1,16], index: 4, kind: input, shape index: {}]
  %s5 = inlined_call_operand.vmem [shape: bf16[96,23], index: 5, kind: output, shape index: {}]
  %s6 = sld [smem:[#allocation0]]
  $region53: #{tpu_custom_call.1} parent=0
    _
  %s8 = ssub.s32 1, %s6
  %s9 = scalar_select 0, %s8, %s6
  loop: start=0, step=1, limit=5
  $region2: #{tpu_custom_call.1} parent=0 // loop_pre_header
    _
  $region3: #{tpu_custom_call.1} parent=0 // loop_header
    %s11 = sphi 0, %s15
    %p12 = scmp.ge.s32.totalorder %s11, 5
    %s21 = sphi 0, %s23
    %s24 = sphi 0, %s21
    %s25 = sphi 0, %s24
    %s41 = sphi 0, %s25
    %s47 = sphi 0, %s49
    %s50 = sphi 0, %s47
    %s51 = sphi 0, %s50
    %s67 = sphi 0, %s51
    %s71 = sphi 0, %s71
    %s73 = sphi 0, %s71
    %s74 = sphi 0, %s73
    %s88 = sphi 0, %s74
    %s92 = sphi 0, %s92
    %s94 = sphi 0, %s92
    %s95 = sphi 0, %s94
    %s109 = sphi 0, %s95
    %s113 = sphi 0, %s113
    %s115 = sphi 0, %s113
    %s116 = sphi 0, %s115
    %s130 = sphi 0, %s116
    %s136 = sphi 0, %s138
    %s139 = sphi 0, %s136
    %s140 = sphi 0, %s139
    %s156 = sphi 0, %s140
  $region4: #{tpu_custom_call.1} parent=0 // loop_header_branch
    %14 = sbr.rel (%p12) target = $region8
  $region5: #{tpu_custom_call.1} parent=0 // loop_body
    %s16 = ssub.s32 %s11, 1
    %s17 = ssub.s32 %s11, 2
    %s18 = sadd.s32 %s11, 1
    %s19 = ssub.s32 %s11, %s18
    %p20 = scmp.eq.s32.totalorder %s19, 0
    %s22 = sadd.s32 %s21, 1
    %s23 = scalar_select %p20, %s21, %s22
    %p26 = pneg %p20
    %p27 = scmp.eq.s32.totalorder %s11, 2
    %p28 = por %p26, %p27
    %p29 = scmp.ne.s32.totalorder %s21, %s24
    %p30 = scmp.eq.s32.totalorder %s11, 0
    %p31 = por %p29, %p30
    %p32 = scmp.ne.s32.totalorder %s21, %s24
    %p33 = scmp.eq.s32.totalorder %s16, 2
    %p34 = por %p32, %p33
    %p35 = scmp.ne.s32.totalorder %s24, %s25
    %p36 = scmp.eq.s32.totalorder %s16, 0
    %p37 = por %p35, %p36
    %p38 = scmp.ne.s32.totalorder %s24, %s25
    %p39 = scmp.eq.s32.totalorder %s17, 2
    %p40 = por %p38, %p39
    %p42 = scmp.ne.s32.totalorder %s25, %s41
    %p43 = scmp.eq.s32.totalorder %s17, 0
    %p44 = por %p42, %p43
    %s45 = ssub.s32 %s11, %s18
    %p46 = scmp.eq.s32.totalorder %s45, 0
    %s48 = sadd.s32 %s47, 1
    %s49 = scalar_select %p46, %s47, %s48
    %p52 = pneg %p46
    %p53 = scmp.eq.s32.totalorder %s11, 2
    %p54 = por %p52, %p53
    %p55 = scmp.ne.s32.totalorder %s47, %s50
    %p56 = scmp.eq.s32.totalorder %s11, 0
    %p57 = por %p55, %p56
    %p58 = scmp.ne.s32.totalorder %s47, %s50
    %p59 = scmp.eq.s32.totalorder %s16, 2
    %p60 = por %p58, %p59
    %p61 = scmp.ne.s32.totalorder %s50, %s51
    %p62 = scmp.eq.s32.totalorder %s16, 0
    %p63 = por %p61, %p62
    %p64 = scmp.ne.s32.totalorder %s50, %s51
    %p65 = scmp.eq.s32.totalorder %s17, 2
    %p66 = por %p64, %p65
    %p68 = scmp.ne.s32.totalorder %s51, %s67
    %p69 = scmp.eq.s32.totalorder %s17, 0
    %p70 = por %p68, %p69
    %s72 = sadd.s32 %s71, 1
    %p75 = scmp.eq.s32.totalorder %s11, 2
    %p76 = scmp.ne.s32.totalorder %s71, %s73
    %p77 = scmp.eq.s32.totalorder %s11, 0
    %p78 = por %p76, %p77
    %p79 = scmp.ne.s32.totalorder %s71, %s73
    %p80 = scmp.eq.s32.totalorder %s16, 2
    %p81 = por %p79, %p80
    %p82 = scmp.ne.s32.totalorder %s73, %s74
    %p83 = scmp.eq.s32.totalorder %s16, 0
    %p84 = por %p82, %p83
    %p85 = scmp.ne.s32.totalorder %s73, %s74
    %p86 = scmp.eq.s32.totalorder %s17, 2
    %p87 = por %p85, %p86
    %p89 = scmp.ne.s32.totalorder %s74, %s88
    %p90 = scmp.eq.s32.totalorder %s17, 0
    %p91 = por %p89, %p90
    %s93 = sadd.s32 %s92, 1
    %p96 = scmp.eq.s32.totalorder %s11, 2
    %p97 = scmp.ne.s32.totalorder %s92, %s94
    %p98 = scmp.eq.s32.totalorder %s11, 0
    %p99 = por %p97, %p98
    %p100 = scmp.ne.s32.totalorder %s92, %s94
    %p101 = scmp.eq.s32.totalorder %s16, 2
    %p102 = por %p100, %p101
    %p103 = scmp.ne.s32.totalorder %s94, %s95
    %p104 = scmp.eq.s32.totalorder %s16, 0
    %p105 = por %p103, %p104
    %p106 = scmp.ne.s32.totalorder %s94, %s95
    %p107 = scmp.eq.s32.totalorder %s17, 2
    %p108 = por %p106, %p107
    %p110 = scmp.ne.s32.totalorder %s95, %s109
    %p111 = scmp.eq.s32.totalorder %s17, 0
    %p112 = por %p110, %p111
    %s114 = sadd.s32 %s113, 1
    %p117 = scmp.eq.s32.totalorder %s11, 2
    %p118 = scmp.ne.s32.totalorder %s113, %s115
    %p119 = scmp.eq.s32.totalorder %s11, 0
    %p120 = por %p118, %p119
    %p121 = scmp.ne.s32.totalorder %s113, %s115
    %p122 = scmp.eq.s32.totalorder %s16, 2
    %p123 = por %p121, %p122
    %p124 = scmp.ne.s32.totalorder %s115, %s116
    %p125 = scmp.eq.s32.totalorder %s16, 0
    %p126 = por %p124, %p125
    %p127 = scmp.ne.s32.totalorder %s115, %s116
    %p128 = scmp.eq.s32.totalorder %s17, 2
    %p129 = por %p127, %p128
    %p131 = scmp.ne.s32.totalorder %s116, %s130
    %p132 = scmp.eq.s32.totalorder %s17, 0
    %p133 = por %p131, %p132
    %s134 = ssub.s32 %s11, %s18
    %p135 = scmp.eq.s32.totalorder %s134, 0
    %s137 = sadd.s32 %s136, 1
    %s138 = scalar_select %p135, %s136, %s137
    %p141 = pneg %p135
    %p142 = scmp.eq.s32.totalorder %s11, 2
    %p143 = por %p141, %p142
    %p144 = scmp.ne.s32.totalorder %s136, %s139
    %p145 = scmp.eq.s32.totalorder %s11, 0
    %p146 = por %p144, %p145
    %p147 = scmp.ne.s32.totalorder %s136, %s139
    %p148 = scmp.eq.s32.totalorder %s16, 2
    %p149 = por %p147, %p148
    %p150 = scmp.ne.s32.totalorder %s139, %s140
    %p151 = scmp.eq.s32.totalorder %s16, 0
    %p152 = por %p150, %p151
    %p153 = scmp.ne.s32.totalorder %s139, %s140
    %p154 = scmp.eq.s32.totalorder %s17, 2
    %p155 = por %p153, %p154
    %p157 = scmp.ne.s32.totalorder %s140, %s156
    %p158 = scmp.eq.s32.totalorder %s17, 0
    %p159 = por %p157, %p158
    %p160 = scmp.le.s32.totalorder 1, %s11
    %p161 = scmp.lt.s32.totalorder %s11, 4
    %p162 = pnand %p160, %p161
    %p163 = pneg %p162
    // Predicated region
    $region9: #{tpu_custom_call.1} parent=5 // pred_check
      _
    $region10: #{tpu_custom_call.1} parent=5 // pred_check_branch
      %165 = sbr.rel (%p162) target = $region12
    $region11: #{tpu_custom_call.1} parent=5 // pred_region
      %s166 = ssub.s32 %s11, 1
      // Predicated region
      $region13: #{tpu_custom_call.1} parent=11 // pred_check
        %p167 = pneg %p84
      $region14: #{tpu_custom_call.1} parent=11 // pred_check_branch
        %169 = sbr.rel (%p167) target = $region16
      $region15: #{tpu_custom_call.1} parent=11 // pred_region
        _
      $region16: #{tpu_custom_call.1} parent=11 // pred_fallthru
        _
      // Predicated region
      $region17: #{tpu_custom_call.1} parent=11 // pred_check
        %p170 = pneg %p105
      $region18: #{tpu_custom_call.1} parent=11 // pred_check_branch
        %172 = sbr.rel (%p170) target = $region20
      $region19: #{tpu_custom_call.1} parent=11 // pred_region
        _
      $region20: #{tpu_custom_call.1} parent=11 // pred_fallthru
        _
      // Predicated region
      $region21: #{tpu_custom_call.1} parent=11 // pred_check
        %p173 = pneg %p126
      $region22: #{tpu_custom_call.1} parent=11 // pred_check_branch
        %175 = sbr.rel (%p173) target = $region24
      $region23: #{tpu_custom_call.1} parent=11 // pred_region
        _
      $region24: #{tpu_custom_call.1} parent=11 // pred_fallthru
        _
    $region12: #{tpu_custom_call.1} parent=5 // pred_fallthru
      _
    %p176 = scmp.lt.s32.totalorder %s11, 3
    // Predicated region
    $region25: #{tpu_custom_call.1} parent=5 // pred_check
      %p177 = pneg %p176
    $region26: #{tpu_custom_call.1} parent=5 // pred_check_branch
      %179 = sbr.rel (%p177) target = $region28
    $region27: #{tpu_custom_call.1} parent=5 // pred_region
      // Predicated region
      $region29: #{tpu_custom_call.1} parent=27 // pred_check
        %p180 = pneg %p31
      $region30: #{tpu_custom_call.1} parent=27 // pred_check_branch
        %182 = sbr.rel (%p180) target = $region32
      $region31: #{tpu_custom_call.1} parent=27 // pred_region
        %s183 = smul.u32 4, %s11
        %p184 = scmp.lt.s32.totalorder %s183, 11
        %s185 = scalar_select %p184, %s183, 11
        %s186 = smul.addr %s185, 8
        %s187 = scalar_lea.vmem %s0, %s186
        %s188 = smul.u32 4, %s11
      $region32: #{tpu_custom_call.1} parent=27 // pred_fallthru
        _
      // Predicated region
      $region33: #{tpu_custom_call.1} parent=27 // pred_check
        %p189 = pneg %p57
      $region34: #{tpu_custom_call.1} parent=27 // pred_check_branch
        %191 = sbr.rel (%p189) target = $region36
      $region35: #{tpu_custom_call.1} parent=27 // pred_region
        %s192 = smul.u32 4, %s11
        %p193 = scmp.lt.s32.totalorder %s192, 11
        %s194 = scalar_select %p193, %s192, 11
        %s195 = smul.addr %s194, 8
        %s196 = scalar_lea.vmem %s1, %s195
        %s197 = smul.u32 4, %s11
      $region36: #{tpu_custom_call.1} parent=27 // pred_fallthru
        _
    $region28: #{tpu_custom_call.1} parent=5 // pred_fallthru
      _
    %p198 = scmp.le.s32.totalorder 1, %s11
    %p199 = scmp.lt.s32.totalorder %s11, 4
    %p200 = pnand %p198, %p199
    %p201 = pneg %p200
    // Predicated region
    $region37: #{tpu_custom_call.1} parent=5 // pred_check
      _
    $region38: #{tpu_custom_call.1} parent=5 // pred_check_branch
      %203 = sbr.rel (%p200) target = $region40
    $region39: #{tpu_custom_call.1} parent=5 // pred_region
      %s204 = ssub.s32 %s11, 1
      %s205 = smul.u32 4, %s16
      %p206 = scmp.lt.s32.totalorder %s205, 11
      %s207 = scalar_select %p206, %s205, 11
      %s208 = smul.addr %s207, 8
      %s209 = scalar_lea.vmem %s0, %s208
      %p210 = pneg %p37
      %p211 = pneg %p34
      %s212 = smul.u32 4, %s16
      %p213 = scmp.lt.s32.totalorder %s212, 11
      %s214 = scalar_select %p213, %s212, 11
      %s215 = smul.addr %s214, 8
      %s216 = scalar_lea.vmem %s1, %s215
      %p217 = pneg %p63
      %p218 = pneg %p60
      %p219 = pneg %p84
      %p220 = pneg %p81
      %p221 = pneg %p105
      %p222 = pneg %p102
      %p223 = pneg %p126
      %p224 = pneg %p123
      %p225 = pneg %p152
      %p226 = pneg %p149
      %s227 = smul.u32 4, %s16
      %p228 = scmp.lt.s32.totalorder %s227, 11
      %s229 = scalar_select %p228, %s227, 11
      %s230 = smul.addr %s229, 4
      %s231 = scalar_lea.vmem %s5, %s230
      %s232 = smul.u32 4, %s16
      %p233 = scmp.lt.s32.totalorder %s232, 11
      %s234 = scalar_select %p233, %s232, 11
      %s235 = smul.addr %s234, 8
      %s236 = scalar_lea.vmem %s0, %s235
      %s237 = smul.u32 4, %s16
      %s238 = smul.u32 4, %s16
      %p239 = scmp.lt.s32.totalorder %s238, 11
      %s240 = scalar_select %p239, %s238, 11
      %s241 = smul.addr %s240, 8
      %s242 = scalar_lea.vmem %s1, %s241
      %s243 = smul.u32 4, %s16
      %s244 = smul.u32 4, %s16
      %p245 = scmp.lt.s32.totalorder %s244, 11
      %s246 = scalar_select %p245, %s244, 11
      %s247 = smul.addr %s246, 4
      %s248 = scalar_lea.vmem %s5, %s247
      %s249 = smul.u32 4, %s16
      %v251 = vld [vmem:[%s242] sm:$0xff]
      %v252 = vld [vmem:[%s242 + $0x8] sm:$0xff]
      %v253 = vld [vmem:[%s242 + $0x10] sm:$0xff]
      %v254 = vld [vmem:[%s242 + $0x18] sm:$0xff]
      %v255 = vld [vmem:[%s2] sm:$0xff]
      %vm256 = vcmask 64512
      %v258 = vsel %vm256, %v251, 0
      %v261 = vsel %vm256, %v252, 0
      %v264 = vsel %vm256, %v253, 0
      %v267 = vsel %vm256, %v254, 0
      %269 = vmatpush.msra.mxu0 0.0
      %270 = vmatpush.msra.mxu0 0.0
      %271 = vmatpush.msra.mxu0 0.0
      %272 = vmatpush.msra.mxu0 0.0
      %273 = vmatpush.msra.mxu0 0.0
      %274 = vmatpush.msra.mxu0 0.0
      %275 = vmatpush.msra.mxu0 0.0
      %276 = vmatpush.msra.mxu0 0.0
      %277 = vmatpush.msra.mxu0 0.0
      %278 = vmatpush.msra.mxu0 0.0
      %279 = vmatpush.msra.mxu0 0.0
      %280 = vmatpush.msra.mxu0 0.0
      %281 = vmatpush.msra.mxu0 0.0
      %282 = vmatpush.msra.mxu0 0.0
      %283 = vmatpush.msra.mxu0 0.0
      %284 = vmatpush.msra.mxu0 %v255
      %285 = vmatmul.f32.gmra.mxu0 %v258
      %v286 = vpop.f32.mrf.mxu0
      %v287 = vadd.f32 0.0, %v286
      %288 = vmatmul.f32.gmra.mxu0 %v261
      %v289 = vpop.f32.mrf.mxu0
      %v290 = vadd.f32 0.0, %v289
      %291 = vmatmul.f32.gmra.mxu0 %v264
      %v292 = vpop.f32.mrf.mxu0
      %v293 = vadd.f32 0.0, %v292
      %294 = vmatmul.f32.gmra.mxu0 %v267
      %v295 = vpop.f32.mrf.mxu0
      %v296 = vadd.f32 0.0, %v295
      %297 = vdwg.mxu0
      %v298 = vld [vmem:[%s3] sm:$0x1]
      %v300 = vperm.slane %v298, 0
      %v302 = vmul.f32 %v287, %v300
      %v303 = vmul.f32 %v290, %v300
      %v304 = vmul.f32 %v293, %v300
      %v305 = vmul.f32 %v296, %v300
      %v306 = vld [vmem:[%s4] sm:$0x1]
      %v308 = vperm.slane %v306, 0
      %v310 = vadd.f32 %v302, %v308
      %v311 = vadd.f32 %v303, %v308
      %v312 = vadd.f32 %v304, %v308
      %v313 = vadd.f32 %v305, %v308
      %v314 = vld [vmem:[%s236] sm:$0xff]
      %v315 = vld [vmem:[%s236 + $0x8] sm:$0xff]
      %v316 = vld [vmem:[%s236 + $0x10] sm:$0xff]
      %v317 = vld [vmem:[%s236 + $0x18] sm:$0xff]
      %v318 = vpack.c.bf16 %v314, %v314
      %v319 = vpack.c.bf16 %v315, %v315
      %v320 = vpack.c.bf16 %v316, %v316
      %v321 = vpack.c.bf16 %v317, %v317
      %v322 = vunpack.c.l.bf16 %v318
      %v323 = vunpack.c.l.bf16 %v319
      %v324 = vunpack.c.l.bf16 %v320
      %v325 = vunpack.c.l.bf16 %v321
      %v326 = vsub.f32 %v314, %v322
      %v327 = vsub.f32 %v315, %v323
      %v328 = vsub.f32 %v316, %v324
      %v329 = vsub.f32 %v317, %v325
      %v330 = vpack.c.bf16 %v326, %v326
      %v331 = vpack.c.bf16 %v327, %v327
      %v332 = vpack.c.bf16 %v328, %v328
      %v333 = vpack.c.bf16 %v329, %v329
      %v334 = vpack.c.bf16 %v310, %v310
      %v335 = vpack.c.bf16 %v311, %v311
      %v336 = vpack.c.bf16 %v312, %v312
      %v337 = vpack.c.bf16 %v313, %v313
      %vm338 = vcmask 125952
      %339 = vst.msk [vmem:[%s248] sm:$0xf] %vm338, %v334
      %340 = vst.msk [vmem:[%s248 + $0x4] sm:$0xf] %vm338, %v335
      %341 = vst.msk [vmem:[%s248 + $0x8] sm:$0xf] %vm338, %v336
      %342 = vst.msk [vmem:[%s248 + $0xc] sm:$0xf] %vm338, %v337
      %vm343 = vcmask 134272
      %344 = vst.msk [vmem:[%s248] sm:$0xf] %vm343, 1065369472
      %345 = vst.msk [vmem:[%s248 + $0x4] sm:$0xf] %vm343, 1065369472
      %346 = vst.msk [vmem:[%s248 + $0x8] sm:$0xf] %vm343, 1065369472
      %347 = vst.msk [vmem:[%s248 + $0xc] sm:$0xf] %vm343, 1065369472
      %352 = vrot.lane.b32.xlu0 %v318, 16
      %v353 = vpop.permute.xlu0 %352
      %354 = vrot.lane.b32.xlu0 %v319, 16
      %v355 = vpop.permute.xlu0 %354
      %356 = vrot.lane.b32.xlu0 %v320, 16
      %v357 = vpop.permute.xlu0 %356
      %358 = vrot.lane.b32.xlu0 %v321, 16
      %v359 = vpop.permute.xlu0 %358
      %vm364 = vcmask 158856
      %365 = vst.msk [vmem:[%s248] sm:$0xf] %vm364, %v353
      %366 = vst.msk [vmem:[%s248 + $0x4] sm:$0xf] %vm364, %v355
      %367 = vst.msk [vmem:[%s248 + $0x8] sm:$0xf] %vm364, %v357
      %368 = vst.msk [vmem:[%s248 + $0xc] sm:$0xf] %vm364, %v359
      %373 = vrot.lane.b32.xlu0 %v330, 19
      %v374 = vpop.permute.xlu0 %373
      %375 = vrot.lane.b32.xlu0 %v331, 19
      %v376 = vpop.permute.xlu0 %375
      %377 = vrot.lane.b32.xlu0 %v332, 19
      %v378 = vpop.permute.xlu0 %377
      %379 = vrot.lane.b32.xlu0 %v333, 19
      %v380 = vpop.permute.xlu0 %379
      %vm385 = vcmask 183456
      %386 = vst.msk [vmem:[%s248] sm:$0xf] %vm385, %v374
      %387 = vst.msk [vmem:[%s248 + $0x4] sm:$0xf] %vm385, %v376
      %388 = vst.msk [vmem:[%s248 + $0x8] sm:$0xf] %vm385, %v378
      %389 = vst.msk [vmem:[%s248 + $0xc] sm:$0xf] %vm385, %v380
      %s390 = smul.u32 4, %s16
      %p391 = scmp.lt.s32.totalorder %s390, 11
      %s392 = scalar_select %p391, %s390, 11
      %s393 = smul.addr %s392, 4
      %s394 = scalar_lea.vmem %s5, %s393
      // Predicated region
      $region41: #{tpu_custom_call.1} parent=39 // pred_check
        %p395 = pneg %p149
      $region42: #{tpu_custom_call.1} parent=39 // pred_check_branch
        %397 = sbr.rel (%p395) target = $region44
      $region43: #{tpu_custom_call.1} parent=39 // pred_region
        %s398 = smul.u32 4, %s16
      $region44: #{tpu_custom_call.1} parent=39 // pred_fallthru
        _
    $region40: #{tpu_custom_call.1} parent=5 // pred_fallthru
      _
    %p399 = scmp.le.s32.totalorder 2, %s11
    // Predicated region
    $region45: #{tpu_custom_call.1} parent=5 // pred_check
      %p400 = pneg %p399
    $region46: #{tpu_custom_call.1} parent=5 // pred_check_branch
      %402 = sbr.rel (%p400) target = $region48
    $region47: #{tpu_custom_call.1} parent=5 // pred_region
      %s403 = ssub.s32 %s11, 2
      // Predicated region
      $region49: #{tpu_custom_call.1} parent=47 // pred_check
        %p404 = pneg %p155
      $region50: #{tpu_custom_call.1} parent=47 // pred_check_branch
        %406 = sbr.rel (%p404) target = $region52
      $region51: #{tpu_custom_call.1} parent=47 // pred_region
        %s407 = smul.u32 4, %s17
        %p408 = scmp.lt.s32.totalorder %s407, 11
        %s409 = scalar_select %p408, %s407, 11
        %s410 = smul.addr %s409, 4
        %s411 = scalar_lea.vmem %s5, %s410
      $region52: #{tpu_custom_call.1} parent=47 // pred_fallthru
        _
    $region48: #{tpu_custom_call.1} parent=5 // pred_fallthru
      _
  $region6: #{tpu_custom_call.1} parent=0 // loop_footer
    %s15 = sadd.s32 1, %s11
  $region7: #{tpu_custom_call.1} parent=0 // loop_footer_branch
    %10 = sbr.rel target = $region3
  $region8: #{tpu_custom_call.1} parent=0 // loop_exit
    _

</llo_original>
